<compile_context>
chip_gen: v7x
topology: tpu7x:2x2x1
jax: 0.10.0
libtpu: 0.0.40
codegen_flags: <defaults>
</compile_context>

<pallas_src>
import functools

import jax
import jax.numpy as jnp
from jax.experimental import pallas as pl
from jax.experimental.pallas import tpu as pltpu


def mdn_kernel(x_ref, w_ref, b_ref, out_ref, *,
               C, apply_bounds, d_bound, lower, epsilon):
    x = x_ref[...]

    # One fused projection on the MXU: (tile_b, D) @ (D, 3C) -> (tile_b, 3C),
    # f32 accumulation regardless of input dtype.
    z = jnp.dot(x, w_ref[...], preferred_element_type=jnp.float32) + b_ref[...]

    zu = z[:, 0 * C:1 * C]
    zv = z[:, 1 * C:2 * C]
    zp = z[:, 2 * C:3 * C]

    # u = d * sigmoid(zu) + lower  (exact sigmoid -> EUP; matches torch.sigmoid)
    if apply_bounds:
        u = d_bound * jax.nn.sigmoid(zu) + lower
    else:
        u = zu

    # v = softplus(zv) + epsilon  (numerically-stable softplus, f32 epilogue)
    v = jnp.maximum(zv, 0.0) + jnp.log1p(jnp.exp(-jnp.abs(zv))) + epsilon

    # p = log_softmax(zp, axis=-1) over exactly the real C columns.
    m = jnp.max(zp, axis=-1, keepdims=True)
    lse = m + jnp.log(jnp.sum(jnp.exp(zp - m), axis=-1, keepdims=True))
    p = zp - lse

    # Single fused store of the whole (tile_b, 3C) block.
    out_ref[...] = jnp.concatenate([u, v, p], axis=-1).astype(out_ref.dtype)


def _pick_tile_b(B, row_bytes, budget_bytes=12 << 20, cap=2048):
    """Batch tile: the whole batch if it fits the soft VMEM budget, else the
    largest divisor of B that is a multiple of 8 (keeps the (8,128) rule)."""
    max_rows = max(1, budget_bytes // max(row_bytes, 1))
    if B <= min(cap, max_rows):
        return B                              # single tile == full dim: always legal
    t = (min(B, cap, max_rows) // 8) * 8
    while t >= 8:
        if B % t == 0:
            return t
        t -= 8
    return B                                  # fallback: single tile (raise VMEM limit)


def mixture_density_forward(x, params, *, epsilon=1e-4, bounds=(0, 1),
                            tile_b=None, matmul_dtype=None):
    """x: (B, input_size). params: dict of wu/bu/wv/bv/wp/bp (PyTorch Linear layout)."""
    B, D = x.shape
    C = params["wu"].shape[0]
    C3 = 3 * C
    out_dtype = x.dtype

    # Fuse the three projections: W = [Wu | Wv | Wp] as (D, 3C); bias as (1, 3C).
    w = jnp.concatenate([params["wu"].T, params["wv"].T, params["wp"].T], axis=1)
    b = jnp.concatenate([params["bu"], params["bv"], params["bp"]]).reshape(1, C3)

    if matmul_dtype is not None:
        # Optional bf16 MXU inputs (v6e/v7x peak); accumulation stays f32.
        x = x.astype(matmul_dtype)
        w = w.astype(matmul_dtype)

    itemsize = jnp.dtype(x.dtype).itemsize
    if tile_b is None:
        # 2x for double-buffered x-block + out-block per row.
        tile_b = _pick_tile_b(B, 2 * (D + C3) * itemsize)
    assert B % tile_b == 0, "batch must be divisible by tile_b"

    if bounds is not None:
        upper, lower = bounds            # PyTorch module unpacks (upper, lower)
        d_bound = float(upper - lower)
        lower = float(lower)
        apply_bounds = True
    else:
        d_bound, lower, apply_bounds = 0.0, 0.0, False

    kernel = functools.partial(
        mdn_kernel, C=C, apply_bounds=apply_bounds,
        d_bound=d_bound, lower=lower, epsilon=float(epsilon))

    grid = (B // tile_b,)
    in_specs = [
        pl.BlockSpec((tile_b, D), lambda i: (i, 0)),   # batch tile
        pl.BlockSpec((D, C3), lambda i: (0, 0)),       # grid-invariant fused weights
        pl.BlockSpec((1, C3), lambda i: (0, 0)),       # grid-invariant fused bias
    ]
    out_specs = pl.BlockSpec((tile_b, C3), lambda i: (i, 0))

    # VMEM estimate: double-buffered x/out blocks + (double-buffered) weights/bias.
    vmem_est = 2 * tile_b * (D + C3) * itemsize + 2 * (D * C3 + C3) * itemsize
    cp_kwargs = dict(dimension_semantics=("parallel",))
    if vmem_est > (16 << 20):  # above the smallest default scoped-VMEM (v5e: 16 MiB)
        cp_kwargs["vmem_limit_bytes"] = int(min(vmem_est + (8 << 20), 64 << 20))

    out = pl.pallas_call(
        kernel,
        out_shape=jax.ShapeDtypeStruct((B, C3), out_dtype),
        grid=grid,
        in_specs=in_specs,
        out_specs=out_specs,
        compiler_params=pltpu.CompilerParams(**cp_kwargs),
    )(x, w, b)

    # Split the fused lane-dense slab back into [u, v, p].
    return [out[:, :C], out[:, C:2 * C], out[:, 2 * C:]]


def _reference_forward(x, params, *, epsilon=1e-4, bounds=(0, 1)):
    """Pure-JAX reference matching the PyTorch forward exactly."""
    zu = x @ params["wu"].T + params["bu"]
    zv = x @ params["wv"].T + params["bv"]
    zp = x @ params["wp"].T + params["bp"]
    u = zu
    if bounds is not None:
        upper, lower = bounds
        d = upper - lower
        u = d * jax.nn.sigmoid(zu) + lower
    v = jax.nn.softplus(zv) + epsilon
    p = jax.nn.log_softmax(zp, axis=-1)
    return [u, v, p]


def init_params(key, input_size, components_size, dtype=jnp.float32):
    """Deterministic init mimicking PyTorch Linear's uniform(-1/sqrt(D), 1/sqrt(D))."""
    ks = jax.random.split(key, 6)
    bound = 1.0 / (input_size ** 0.5)
    u = lambda k, shape: jax.random.uniform(k, shape, dtype, minval=-bound, maxval=bound)
    return {
        "wu": u(ks[0], (components_size, input_size)),
        "bu": u(ks[1], (components_size,)),
        "wv": u(ks[2], (components_size, input_size)),
        "bv": u(ks[3], (components_size,)),
        "wp": u(ks[4], (components_size, input_size)),
        "bp": u(ks[5], (components_size,)),
    }


if __name__ == "__main__":
    B, INPUT_SIZE, COMPONENTS = 16, 32, 16

    key = jax.random.PRNGKey(0)
    k_x, k_p = jax.random.split(key)
    x = jax.random.normal(k_x, (B, INPUT_SIZE), dtype=jnp.float32)
    params = init_params(k_p, INPUT_SIZE, COMPONENTS)

    u, v, p = mixture_density_forward(x, params, epsilon=1e-4, bounds=(0, 1))
    jax.block_until_ready((u, v, p))

    u_ref, v_ref, p_ref = _reference_forward(x, params, epsilon=1e-4, bounds=(0, 1))
    assert jnp.allclose(u, u_ref, atol=1e-5, rtol=1e-5)
    assert jnp.allclose(v, v_ref, atol=1e-5, rtol=1e-5)
    assert jnp.allclose(p, p_ref, atol=1e-5, rtol=1e-5)

    print("KERNEL_OK")
</pallas_src>

<mosaic_0001>
module attributes {stable_mosaic.version = 11 : i64} {
  func.func @mdn_kernel(%arg0: i32, %arg1: memref<16x32xf32, #tpu.memory_space<vmem>>, %arg2: memref<32x48xf32, #tpu.memory_space<vmem>>, %arg3: memref<1x48xf32, #tpu.memory_space<vmem>>, %arg4: memref<16x48xf32, #tpu.memory_space<vmem>>) attributes {dimension_semantics = [#tpu.dimension_semantics<parallel>], iteration_bounds = array<i64: 1>, scalar_prefetch = 0 : i64, scratch_operands = 0 : i64, tpu.core_type = #tpu.core_type<tc>, window_params = [{transform_indices = @transform_0, window_bounds = array<i64: 16, 32>}, {pipeline_mode = #tpu.pipeline_mode<synchronous>, transform_indices = @transform_1, window_bounds = array<i64: 32, 48>}, {pipeline_mode = #tpu.pipeline_mode<synchronous>, transform_indices = @transform_2, window_bounds = array<i64: 1, 48>}, {transform_indices = @transform_3, window_bounds = array<i64: 16, 48>}]} {
    %c0 = arith.constant 0 : index
    %c0_0 = arith.constant 0 : index
    %0 = vector.load %arg1[%c0, %c0_0] : memref<16x32xf32, #tpu.memory_space<vmem>>, vector<16x32xf32>
    %c0_1 = arith.constant 0 : index
    %c0_2 = arith.constant 0 : index
    %1 = vector.load %arg2[%c0_1, %c0_2] : memref<32x48xf32, #tpu.memory_space<vmem>>, vector<32x48xf32>
    %cst = arith.constant dense<0.000000e+00> : vector<16x48xf32>
    %2 = tpu.matmul %0, %1, %cst {dimension_numbers = #tpu.dot_dimension_numbers<[1], [0], [0], [1], [0, 0, 1, 1], [], []>} : vector<16x32xf32>, vector<32x48xf32>, vector<16x48xf32> -> vector<16x48xf32>
    %c0_3 = arith.constant 0 : index
    %c0_4 = arith.constant 0 : index
    %3 = vector.load %arg3[%c0_3, %c0_4] : memref<1x48xf32, #tpu.memory_space<vmem>>, vector<1x48xf32>
    %4 = vector.broadcast %3 : vector<1x48xf32> to vector<16x48xf32>
    %5 = arith.addf %2, %4 : vector<16x48xf32>
    %6 = vector.extract_strided_slice %5 {offsets = [0, 0], sizes = [16, 16], strides = [1, 1]} : vector<16x48xf32> to vector<16x16xf32>
    %7 = vector.extract_strided_slice %5 {offsets = [0, 16], sizes = [16, 16], strides = [1, 1]} : vector<16x48xf32> to vector<16x16xf32>
    %8 = vector.extract_strided_slice %5 {offsets = [0, 32], sizes = [16, 16], strides = [1, 1]} : vector<16x48xf32> to vector<16x16xf32>
    %9 = arith.negf %6 : vector<16x16xf32>
    %10 = math.exp %9 : vector<16x16xf32>
    %cst_5 = arith.constant 1.000000e+00 : f32
    %11 = vector.broadcast %cst_5 : f32 to vector<16x16xf32>
    %12 = arith.addf %11, %10 : vector<16x16xf32>
    %13 = arith.divf %11, %12 : vector<16x16xf32>
    %cst_6 = arith.constant -1.000000e+00 : f32
    %14 = vector.broadcast %cst_6 : f32 to vector<16x16xf32>
    %15 = arith.mulf %14, %13 : vector<16x16xf32>
    %cst_7 = arith.constant 1.000000e+00 : f32
    %16 = vector.broadcast %cst_7 : f32 to vector<16x16xf32>
    %17 = arith.addf %15, %16 : vector<16x16xf32>
    %cst_8 = arith.constant 0.000000e+00 : f32
    %18 = vector.broadcast %cst_8 : f32 to vector<16x16xf32>
    %19 = arith.maximumf %7, %18 : vector<16x16xf32>
    %20 = math.absf %7 : vector<16x16xf32>
    %cst_9 = arith.constant 0.000000e+00 : f32
    %21 = vector.broadcast %cst_9 : f32 to vector<16x16xf32>
    %22 = arith.subf %21, %20 : vector<16x16xf32>
    %23 = math.exp %22 : vector<16x16xf32>
    %24 = math.log1p %23 : vector<16x16xf32>
    %25 = arith.addf %19, %24 : vector<16x16xf32>
    %cst_10 = arith.constant 9.99999974E-5 : f32
    %26 = vector.broadcast %cst_10 : f32 to vector<16x16xf32>
    %27 = arith.addf %25, %26 : vector<16x16xf32>
    %cst_11 = arith.constant dense<0xFF800000> : vector<16xf32>
    %28 = vector.multi_reduction <maximumf>, %8, %cst_11 [1] : vector<16x16xf32> to vector<16xf32>
    %29 = vector.shape_cast %28 : vector<16xf32> to vector<16x1xf32>
    %30 = vector.broadcast %29 : vector<16x1xf32> to vector<16x16xf32>
    %31 = arith.subf %8, %30 : vector<16x16xf32>
    %32 = math.exp %31 : vector<16x16xf32>
    %cst_12 = arith.constant dense<0.000000e+00> : vector<16xf32>
    %33 = vector.multi_reduction <add>, %32, %cst_12 [1] : vector<16x16xf32> to vector<16xf32>
    %34 = vector.shape_cast %33 : vector<16xf32> to vector<16x1xf32>
    %35 = math.log %34 : vector<16x1xf32>
    %36 = arith.addf %29, %35 : vector<16x1xf32>
    %37 = vector.broadcast %36 : vector<16x1xf32> to vector<16x16xf32>
    %38 = arith.subf %8, %37 : vector<16x16xf32>
    %39 = tpu.concatenate %17, %27, %38 in 1 : vector<16x16xf32>, vector<16x16xf32>, vector<16x16xf32> -> vector<16x48xf32>
    %c0_13 = arith.constant 0 : index
    %c0_14 = arith.constant 0 : index
    %40 = vector.load %arg4[%c0_13, %c0_14] : memref<16x48xf32, #tpu.memory_space<vmem>>, vector<16x48xf32>
    tpu.vector_store %arg4[%c0_13, %c0_14], %39 {strides = array<i32>} : memref<16x48xf32, #tpu.memory_space<vmem>>, vector<16x48xf32>,
    return
  }
  func.func @transform_0(%arg0: i32) -> (i32, i32) {
    %c0_i32 = arith.constant 0 : i32
    %c0_i32_0 = arith.constant 0 : i32
    return %arg0, %c0_i32 : i32, i32
  }
  func.func @transform_1(%arg0: i32) -> (i32, i32) {
    %c0_i32 = arith.constant 0 : i32
    %c0_i32_0 = arith.constant 0 : i32
    %c0_i32_1 = arith.constant 0 : i32
    return %c0_i32, %c0_i32_0 : i32, i32
  }
  func.func @transform_2(%arg0: i32) -> (i32, i32) {
    %c0_i32 = arith.constant 0 : i32
    %c0_i32_0 = arith.constant 0 : i32
    %c0_i32_1 = arith.constant 0 : i32
    return %c0_i32, %c0_i32_0 : i32, i32
  }
  func.func @transform_3(%arg0: i32) -> (i32, i32) {
    %c0_i32 = arith.constant 0 : i32
    %c0_i32_0 = arith.constant 0 : i32
    return %arg0, %c0_i32 : i32, i32
  }
}

</mosaic_0001>

<llo_original>
// kernel: tpu_custom_call.1
$region0: #{tpu_custom_call.1}
  #allocation0 [shape = 'u32[]', space=smem, size = 0x4, offset = 0x4, fixed_abs, tag = 'smem constant byte address 0x4 - core index']
  #allocation1 [shape = 'u32[144,128]{1,0:T(1,128)}', space=vmem, size = 0x12000, scoped, tag = 'internal scratch']
  %s0 = inlined_call_operand.hbm [shape: f32[16,32], index: 0, kind: input, shape index: {}]
  %s1 = inlined_call_operand.hbm [shape: f32[32,48], index: 1, kind: input, shape index: {}]
  %s2 = inlined_call_operand.vmem [shape: f32[1,48], index: 2, kind: input, shape index: {}]
  %s3 = inlined_call_operand.hbm [shape: f32[16,48], index: 3, kind: output, shape index: {}]
  %s4 = sld [smem:[#allocation0]]
  $region30: #{tpu_custom_call.1} parent=0
    _
  %s6 = ssub.s32 1, %s4
  %s7 = scalar_select 0, %s6, %s4
  $region1: #{tpu_custom_call.1} parent=0
    #allocation2 [shape = 'u8[8192]{0}', space=vmem, size = 0x2000, scoped, tag = 'input window, operand 0, single buffered']
    #allocation3 [shape = 's32[1]{0}', space=sflag, size = 0x4, scoped, tag = 'scoped memory for tpu_custom_call.1']
    #allocation4 [shape = 's32[1]{0}', space=sflag, size = 0x4, scoped, tag = 'scoped memory for tpu_custom_call.1']
    #allocation5 [shape = 'u8[16384]{0}', space=vmem, size = 0x4000, scoped, tag = 'input window, operand 1, single buffered']
    #allocation6 [shape = 's32[1]{0}', space=sflag, size = 0x4, scoped, tag = 'scoped memory for tpu_custom_call.1']
    #allocation7 [shape = 'u8[8192]{0}', space=vmem, size = 0x2000, scoped, tag = 'output window, operand 0, single buffered']
    %8 = vsyncpa [#allocation3], 0
    %9 = vsyncpa [#allocation6], 0
    %10 = vsyncpa [#allocation4], 0
    // Predicated region
    $region2: #{tpu_custom_call.1} parent=1 // pred_check
      _
    $region3: #{tpu_custom_call.1} parent=1 // pred_check_branch
      %12 = sbr.rel (0) target = $region5
    $region4: #{tpu_custom_call.1} parent=1 // pred_region
      %s14 = ssub.s32 256, 256
      %15 = vsyncadd [#allocation3], %s14
      %s16 = sshll.u32 [#allocation2], 4
      %s17 = int_to_ptr.vmem [resolvable:$true] %s16
      %22 = dma.hbm_to_vmem [thread:$0]  %s0, 256, %s17, [#allocation3], 128, 128, 8
    $region5: #{tpu_custom_call.1} parent=1 // pred_fallthru
      _
    // Predicated region
    $region6: #{tpu_custom_call.1} parent=1 // pred_check
      _
    $region7: #{tpu_custom_call.1} parent=1 // pred_check_branch
      %24 = sbr.rel (0) target = $region9
    $region8: #{tpu_custom_call.1} parent=1 // pred_region
      %s26 = ssub.s32 512, 512
      %27 = vsyncadd [#allocation6], %s26
      %s28 = sshll.u32 [#allocation5], 4
      %s29 = int_to_ptr.vmem [resolvable:$true] %s28
      %34 = dma.hbm_to_vmem [thread:$0]  %s1, 512, %s29, [#allocation6], 128, 128, 8
    $region9: #{tpu_custom_call.1} parent=1 // pred_fallthru
      _
    // Predicated region
    $region10: #{tpu_custom_call.1} parent=1 // pred_check
      _
    $region11: #{tpu_custom_call.1} parent=1 // pred_check_branch
      %36 = sbr.rel (0) target = $region13
    $region12: #{tpu_custom_call.1} parent=1 // pred_region
      _
    $region13: #{tpu_custom_call.1} parent=1 // pred_fallthru
      _
    // Predicated region
    $region14: #{tpu_custom_call.1} parent=1 // pred_check
      _
    $region15: #{tpu_custom_call.1} parent=1 // pred_check_branch
      %38 = sbr.rel (0) target = $region17
    $region16: #{tpu_custom_call.1} parent=1 // pred_region
      %39 = dma.done [#allocation3], 256
    $region17: #{tpu_custom_call.1} parent=1 // pred_fallthru
      _
    // Predicated region
    $region18: #{tpu_custom_call.1} parent=1 // pred_check
      _
    $region19: #{tpu_custom_call.1} parent=1 // pred_check_branch
      %41 = sbr.rel (0) target = $region21
    $region20: #{tpu_custom_call.1} parent=1 // pred_region
      %42 = dma.done [#allocation6], 512
    $region21: #{tpu_custom_call.1} parent=1 // pred_fallthru
      _
    %v43 = vld [vmem:[#allocation2] sm:$0xff]
    %v44 = vld [vmem:[#allocation2 + $0x8] sm:$0xff]
    %v45 = vld [vmem:[#allocation5] sm:$0xff]
    %v46 = vld [vmem:[#allocation5 + $0x8] sm:$0xff]
    %v47 = vld [vmem:[#allocation5 + $0x10] sm:$0xff]
    %v48 = vld [vmem:[#allocation5 + $0x18] sm:$0xff]
    %v49 = vld [vmem:[%s2] sm:$0x1]
    %v51 = vlaneseq
    %v52 = vshrl.u32 %v51, 7
    %v53 = vsub.s32 0, %v52
    %v54 = vrot.slane %v49, %v53
    %vm56 = vcmask 261120
    %v58 = vsel %vm56, %v43, 0
    %v61 = vsel %vm56, %v44, 0
    %63 = vmatprep.subr.mxu0 0.0
    %64 = vmatpush1.msra.mxu0 %v45
    %65 = vmatprep.subr.mxu0 0.0
    %66 = vmatpush1.msra.mxu0 %v46
    %67 = vmatprep.subr.mxu0 0.0
    %68 = vmatpush1.msra.mxu0 %v47
    %69 = vmatprep.subr.mxu0 0.0
    %70 = vmatpush1.msra.mxu0 %v48
    %71 = vmatprep.subr.mxu0 0.0
    %72 = vmatpush1.msra.mxu0 0.0
    %73 = vmatprep.subr.mxu0 0.0
    %74 = vmatpush1.msra.mxu0 0.0
    %75 = vmatprep.subr.mxu0 0.0
    %76 = vmatpush1.msra.mxu0 0.0
    %77 = vmatprep.subr.mxu0 0.0
    %78 = vmatpush1.msra.mxu0 0.0
    %79 = vmatprep.subr.mxu0 0.0
    %80 = vmatpush1.msra.mxu0 0.0
    %81 = vmatprep.subr.mxu0 0.0
    %82 = vmatpush1.msra.mxu0 0.0
    %83 = vmatprep.subr.mxu0 0.0
    %84 = vmatpush1.msra.mxu0 0.0
    %85 = vmatprep.subr.mxu0 0.0
    %86 = vmatpush1.msra.mxu0 0.0
    %87 = vmatprep.subr.mxu0 0.0
    %88 = vmatpush1.msra.mxu0 0.0
    %89 = vmatprep.subr.mxu0 0.0
    %90 = vmatpush1.msra.mxu0 0.0
    %91 = vmatprep.subr.mxu0 0.0
    %92 = vmatpush1.msra.mxu0 0.0
    %93 = vmatprep.subr.mxu0 0.0
    %94 = vmatpush1.msra.mxu0 0.0
    %95 = vmatprep.subr.mxu0 0.0
    %96 = vmatpush1.msra.mxu0 0.0
    %97 = vmatprep.subr.mxu0 0.0
    %98 = vmatpush1.msra.mxu0 0.0
    %99 = vmatprep.subr.mxu0 0.0
    %100 = vmatpush1.msra.mxu0 0.0
    %101 = vmatprep.subr.mxu0 0.0
    %102 = vmatpush1.msra.mxu0 0.0
    %103 = vmatprep.subr.mxu0 0.0
    %104 = vmatpush1.msra.mxu0 0.0
    %105 = vmatprep.subr.mxu0 0.0
    %106 = vmatpush1.msra.mxu0 0.0
    %107 = vmatprep.subr.mxu0 0.0
    %108 = vmatpush1.msra.mxu0 0.0
    %109 = vmatprep.subr.mxu0 0.0
    %110 = vmatpush1.msra.mxu0 0.0
    %111 = vmatprep.subr.mxu0 0.0
    %112 = vmatpush1.msra.mxu0 0.0
    %113 = vmatprep.subr.mxu0 0.0
    %114 = vmatpush1.msra.mxu0 0.0
    %115 = vmatprep.subr.mxu0 0.0
    %116 = vmatpush1.msra.mxu0 0.0
    %117 = vmatprep.subr.mxu0 0.0
    %118 = vmatpush1.msra.mxu0 0.0
    %119 = vmatprep.subr.mxu0 0.0
    %120 = vmatpush1.msra.mxu0 0.0
    %121 = vmatprep.subr.mxu0 0.0
    %122 = vmatpush1.msra.mxu0 0.0
    %123 = vmatprep.subr.mxu0 0.0
    %124 = vmatpush1.msra.mxu0 0.0
    %125 = vmatprep.subr.mxu0 0.0
    %126 = vmatpush1.msra.mxu0 0.0
    %127 = vmatprep.mubr.f32.mxu0 0.0
    %128 = vmatmul.mubr.f32.gmra.mrb[0].mxu0 %v58
    %v129 = vpop.f32.mrb[0].mxu0
    %v130 = vadd.f32 %v54, %v129
    %v131 = vpop.f32.mrb[0].mxu0
    %132 = vmatprep.mubr.f32.mxu0 0.0
    %133 = vmatmul.mubr.f32.gmra.mrb[0].mxu0 %v61
    %v134 = vpop.f32.mrb[0].mxu0
    %v135 = vadd.f32 %v54, %v134
    %v136 = vpop.f32.mrb[0].mxu0
    %137 = vdwg.mxu0
    %v138 = vxor.u32 %v130, 2147483648
    %v139 = vxor.u32 %v135, 2147483648
    %v140 = vmul.f32 %v138, 1.442695
    %v141 = vpow.pop %v140
    %v142 = vmul.f32 %v139, 1.442695
    %v143 = vpow.pop %v142
    %v144 = vadd.f32 %v141, 1.0
    %v145 = vadd.f32 %v143, 1.0
    %v146 = vrcp.pop %v144
    %v147 = vmul.f32 1.0, %v146
    %v148 = vrcp.pop %v145
    %v149 = vmul.f32 1.0, %v148
    %v150 = vmul.f32 %v147, -1.0
    %v151 = vmul.f32 %v149, -1.0
    %v152 = vadd.f32 %v150, 1.0
    %v153 = vadd.f32 %v151, 1.0
    %v154 = vmax.f32 %v130, 0.0
    %v155 = vmax.f32 %v135, 0.0
    %v156 = vand.u32 2147483647, %v130
    %v157 = vand.u32 2147483647, %v135
    %v158 = vsub.f32 0.0, %v156
    %v159 = vsub.f32 0.0, %v157
    %v160 = vmul.f32 %v158, 1.442695
    %v161 = vpow.pop %v160
    %v162 = vmul.f32 %v159, 1.442695
    %v163 = vpow.pop %v162
    %v164 = vadd.f32 %v161, 1.0
    %v165 = vlog2.pop %v164
    %v166 = vmul.f32 %v165, 0.6931472
    %v167 = vmul.f32 -0.5, %v161
    %v168 = vadd.f32 %v167, 1.0
    %v169 = vmul.f32 %v168, %v161
    %v170 = vand.u32 2147483647, %v161
    %vm171 = vcmp.lt.f32.partialorder %v170, 0.0004427343
    %v172 = vsel %vm171, %v169, %v166
    %v173 = vadd.f32 %v163, 1.0
    %v174 = vlog2.pop %v173
    %v175 = vmul.f32 %v174, 0.6931472
    %v176 = vmul.f32 -0.5, %v163
    %v177 = vadd.f32 %v176, 1.0
    %v178 = vmul.f32 %v177, %v163
    %v179 = vand.u32 2147483647, %v163
    %vm180 = vcmp.lt.f32.partialorder %v179, 0.0004427343
    %v181 = vsel %vm180, %v178, %v175
    %v182 = vadd.f32 %v154, %v172
    %v183 = vadd.f32 %v155, %v181
    %v184 = vadd.f32 %v182, 0.0001
    %v185 = vadd.f32 %v183, 0.0001
    %vm186 = vcmask 392448
    %v187 = vsel %vm186, %v130, -inf
    %188 = vmax.xlane.f32.xlu0 %v187
    %v189 = vpop.xlane.xlu0 %188
    %v190 = vsel %vm186, %v135, -inf
    %191 = vmax.xlane.f32.xlu0 %v190
    %v192 = vpop.xlane.xlu0 %191
    %v193 = vsub.f32 %v130, %v189
    %v194 = vsub.f32 %v135, %v192
    %v195 = vmul.f32 %v193, 1.442695
    %v196 = vpow.pop %v195
    %v197 = vmul.f32 %v194, 1.442695
    %v198 = vpow.pop %v197
    %201 = vrot.lane.b32.xlu0 %v196, 96
    %v202 = vpop.permute.xlu0 %201
    %203 = vrot.lane.b32.xlu0 %v198, 96
    %v204 = vpop.permute.xlu0 %203
    %vm207 = vcmask 130048
    %v208 = vsel %vm207, %v202, 0.0
    %209 = vadd.xlane.f32.xlu0 %v208
    %v210 = vpop.xlane.xlu0 %209
    %v211 = vsel %vm207, %v204, 0.0
    %212 = vadd.xlane.f32.xlu0 %v211
    %v213 = vpop.xlane.xlu0 %212
    %v214 = vlog2.pop %v210
    %v215 = vmul.f32 %v214, 0.6931472
    %v216 = vlog2.pop %v213
    %v217 = vmul.f32 %v216, 0.6931472
    %v218 = vadd.f32 %v189, %v215
    %v219 = vadd.f32 %v192, %v217
    %v220 = vsub.f32 %v130, %v218
    %v221 = vsub.f32 %v135, %v219
    %v222 = vsel %vm207, %v152, %v184
    %v223 = vsel %vm207, %v153, %v185
    %v224 = vsel %vm56, %v222, %v220
    %v225 = vsel %vm56, %v223, %v221
    %vm226 = vcmask 392192
    %227 = vst.msk [vmem:[#allocation7] sm:$0xff] %vm226, %v224
    %228 = vst.msk [vmem:[#allocation7 + $0x8] sm:$0xff] %vm226, %v225
    // Predicated region
    $region22: #{tpu_custom_call.1} parent=1 // pred_check
      _
    $region23: #{tpu_custom_call.1} parent=1 // pred_check_branch
      %230 = sbr.rel (0) target = $region25
    $region24: #{tpu_custom_call.1} parent=1 // pred_region
      %s232 = ssub.s32 256, 256
      %233 = vsyncadd [#allocation4], %s232
      %s234 = sshll.u32 [#allocation7], 4
      %s235 = int_to_ptr.vmem [resolvable:$true] %s234
      %240 = dma.vmem_to_hbm [thread:$0]  %s235, 256, %s3, [#allocation4], 128, 128, 8
    $region25: #{tpu_custom_call.1} parent=1 // pred_fallthru
      _
    // Predicated region
    $region26: #{tpu_custom_call.1} parent=1 // pred_check
      _
    $region27: #{tpu_custom_call.1} parent=1 // pred_check_branch
      %242 = sbr.rel (0) target = $region29
    $region28: #{tpu_custom_call.1} parent=1 // pred_region
      %243 = dma.done [#allocation4], 256
    $region29: #{tpu_custom_call.1} parent=1 // pred_fallthru
      _
    %244 = vsyncpa [#allocation3], 1
    %245 = vsyncpa [#allocation6], 1
    %246 = vsyncpa [#allocation4], 1

</llo_original>
